<compile_context>
chip_gen: v6e
topology: v6e:2x2x1
jax: 0.10.0
libtpu: 0.0.40
codegen_flags: <defaults>
</compile_context>

<pallas_src>
import jax
import jax.numpy as jnp
from jax.experimental import pallas as pl
from jax.experimental.pallas import tpu as pltpu


def _abs_pos_emb_kernel(emb_t_ref, q_ref, o_ref):
    # emb_t_ref: (d, TILE_J) — resident across the M-tile grid axis.
    # q_ref:     (TILE_M, d)
    # o_ref:     (TILE_M, TILE_J)
    # Pure MXU matmul; nothing is rebuilt per grid step.
    o_ref[...] = jnp.dot(
        q_ref[...], emb_t_ref[...], preferred_element_type=jnp.float32
    )


def _round_up(x, m):
    return ((x + m - 1) // m) * m


def abs_pos_emb(q, height, width, *, tile_m=512, tile_j=2048):
    """q: (B, heads, I, d) f32; height: (H, d); width: (W, d).
    Returns logits: (B, heads, I, H*W) f32."""
    B, NH, I, d = q.shape
    H, dh = height.shape
    W, dw = width.shape
    assert dh == d and dw == d
    J = H * W

    # Hoist emb construction + transpose out of the kernel: (d, J), built once.
    emb_t = (height[:, None, :] + width[None, :, :]).reshape(J, d).T  # (d, J)

    # Lane-dense output: pad J up to a multiple of 128 so stores are unmasked.
    J_pad = _round_up(J, 128)
    if J_pad != J:
        emb_t = jnp.pad(emb_t, ((0, 0), (0, J_pad - J)))

    # Collapse (B, heads, I) into the matmul M dimension.
    M = B * NH * I
    q_flat = q.reshape(M, d)

    TILE_M = min(tile_m, _round_up(M, 8))   # multiple of 8 sublanes
    TILE_J = min(tile_j, J_pad)             # multiple of 128 lanes
    M_pad = _round_up(M, TILE_M)
    if M_pad != M:
        q_flat = jnp.pad(q_flat, ((0, M_pad - M), (0, 0)))

    grid = (M_pad // TILE_M, J_pad // TILE_J)

    out = pl.pallas_call(
        _abs_pos_emb_kernel,
        out_shape=jax.ShapeDtypeStruct((M_pad, J_pad), jnp.float32),
        grid_spec=pltpu.PrefetchScalarGridSpec(
            num_scalar_prefetch=0,
            grid=grid,
            in_specs=[
                # emb_t: constant block index along M -> VMEM-resident rhs.
                pl.BlockSpec((d, TILE_J), lambda i, j: (0, j)),
                # q row tile; independent of the J axis.
                pl.BlockSpec((TILE_M, d), lambda i, j: (i, 0)),
            ],
            out_specs=pl.BlockSpec((TILE_M, TILE_J), lambda i, j: (i, j)),
        ),
        compiler_params=pltpu.CompilerParams(
            dimension_semantics=("parallel", "parallel"),
            vmem_limit_bytes=64 << 20,
        ),
    )(emb_t, q_flat)

    return out[:M, :J].reshape(B, NH, I, J)


def abs_pos_emb_ref(q, height, width):
    emb = height[:, None, :] + width[None, :, :]
    emb = emb.reshape(-1, height.shape[-1])
    return jnp.einsum('bhid,jd->bhij', q, emb)


if __name__ == "__main__":
    # Small shapes consistent with the module: fmap 8x8, dim_head 32,
    # q over the same feature map -> seq = 8*8 = 64.
    B, NH = 2, 4
    fmap = 8
    dim_head = 32
    H = W = fmap
    I = H * W

    key = jax.random.PRNGKey(0)
    k_h, k_w, k_q = jax.random.split(key, 3)
    scale = dim_head ** (-0.5)
    height = jax.random.normal(k_h, (H, dim_head), dtype=jnp.float32) * scale
    width = jax.random.normal(k_w, (W, dim_head), dtype=jnp.float32) * scale
    q = jax.random.normal(k_q, (B, NH, I, dim_head), dtype=jnp.float32)

    logits = abs_pos_emb(q, height, width)
    logits = jax.block_until_ready(logits)

    ref = abs_pos_emb_ref(q, height, width)
    assert logits.shape == (B, NH, I, H * W)
    assert jnp.allclose(logits, ref, atol=1e-5, rtol=1e-5)

    print("KERNEL_OK")
</pallas_src>

<mosaic_0001>
module attributes {stable_mosaic.version = 11 : i64} {
  func.func @_abs_pos_emb_kernel(%arg0: i32, %arg1: i32, %arg2: memref<32x128xf32, #tpu.memory_space<vmem>>, %arg3: memref<512x32xf32, #tpu.memory_space<vmem>>, %arg4: memref<512x128xf32, #tpu.memory_space<vmem>>) attributes {dimension_semantics = [#tpu.dimension_semantics<parallel>, #tpu.dimension_semantics<parallel>], iteration_bounds = array<i64: 1, 1>, scalar_prefetch = 0 : i64, scratch_operands = 0 : i64, tpu.core_type = #tpu.core_type<tc>, window_params = [{transform_indices = @transform_0, window_bounds = array<i64: 32, 128>}, {transform_indices = @transform_1, window_bounds = array<i64: 512, 32>}, {transform_indices = @transform_2, window_bounds = array<i64: 512, 128>}]} {
    %c0 = arith.constant 0 : index
    %c0_0 = arith.constant 0 : index
    %0 = vector.load %arg3[%c0, %c0_0] : memref<512x32xf32, #tpu.memory_space<vmem>>, vector<512x32xf32>
    %c0_1 = arith.constant 0 : index
    %c0_2 = arith.constant 0 : index
    %1 = vector.load %arg2[%c0_1, %c0_2] : memref<32x128xf32, #tpu.memory_space<vmem>>, vector<32x128xf32>
    %cst = arith.constant dense<0.000000e+00> : vector<512x128xf32>
    %2 = tpu.matmul %0, %1, %cst {dimension_numbers = #tpu.dot_dimension_numbers<[1], [0], [0], [1], [0, 0, 1, 1], [], []>} : vector<512x32xf32>, vector<32x128xf32>, vector<512x128xf32> -> vector<512x128xf32>
    %c0_3 = arith.constant 0 : index
    %c0_4 = arith.constant 0 : index
    %3 = vector.load %arg4[%c0_3, %c0_4] : memref<512x128xf32, #tpu.memory_space<vmem>>, vector<512x128xf32>
    tpu.vector_store %arg4[%c0_3, %c0_4], %2 {strides = array<i32>} : memref<512x128xf32, #tpu.memory_space<vmem>>, vector<512x128xf32>,
    return
  }
  func.func @transform_0(%arg0: i32, %arg1: i32) -> (i32, i32) {
    %c0_i32 = arith.constant 0 : i32
    %c0_i32_0 = arith.constant 0 : i32
    return %c0_i32, %arg1 : i32, i32
  }
  func.func @transform_1(%arg0: i32, %arg1: i32) -> (i32, i32) {
    %c0_i32 = arith.constant 0 : i32
    %c0_i32_0 = arith.constant 0 : i32
    return %arg0, %c0_i32 : i32, i32
  }
  func.func @transform_2(%arg0: i32, %arg1: i32) -> (i32, i32) {
    %c0_i32 = arith.constant 0 : i32
    return %arg0, %arg1 : i32, i32
  }
}

</mosaic_0001>

<llo_original>
// kernel: tpu_custom_call.1
$region0: #{tpu_custom_call.1}
  #allocation0 [shape = 'u32[]', space=smem, size = 0x4, offset = 0x4, fixed_abs, tag = 'smem constant byte address 0x4 - core index']
  #allocation1 [shape = 'u32[144,128]{1,0:T(1,128)}', space=vmem, size = 0x12000, scoped, tag = 'internal scratch']
  %s0 = inlined_call_operand.vmem [shape: f32[32,128], index: 0, kind: input, shape index: {}]
  %s1 = inlined_call_operand.vmem [shape: f32[512,32], index: 1, kind: input, shape index: {}]
  %s2 = inlined_call_operand.hbm [shape: f32[512,128], index: 2, kind: output, shape index: {}]
  %s3 = sld [smem:[#allocation0]]
  $region18: #{tpu_custom_call.1} parent=0
    _
  %s5 = ssub.s32 1, %s3
  %s6 = scalar_select 0, %s5, %s3
  $region1: #{tpu_custom_call.1} parent=0
    #allocation2 [shape = 'u8[262144]{0}', space=vmem, size = 0x40000, scoped, tag = 'output window, operand 0, single buffered']
    #allocation3 [shape = 's32[1]{0}', space=sflag, size = 0x4, scoped, tag = 'scoped memory for tpu_custom_call.1']
    %7 = vsyncpa [#allocation3], 0
    // Predicated region
    $region2: #{tpu_custom_call.1} parent=1 // pred_check
      _
    $region3: #{tpu_custom_call.1} parent=1 // pred_check_branch
      %9 = sbr.rel (0) target = $region5
    $region4: #{tpu_custom_call.1} parent=1 // pred_region
      _
    $region5: #{tpu_custom_call.1} parent=1 // pred_fallthru
      _
    // Predicated region
    $region6: #{tpu_custom_call.1} parent=1 // pred_check
      _
    $region7: #{tpu_custom_call.1} parent=1 // pred_check_branch
      %11 = sbr.rel (0) target = $region9
    $region8: #{tpu_custom_call.1} parent=1 // pred_region
      _
    $region9: #{tpu_custom_call.1} parent=1 // pred_fallthru
      _
    %v12 = vld [vmem:[%s1] sm:$0xff]
    %v13 = vld [vmem:[%s1 + $0x8] sm:$0xff]
    %v14 = vld [vmem:[%s1 + $0x10] sm:$0xff]
    %v15 = vld [vmem:[%s1 + $0x18] sm:$0xff]
    %v16 = vld [vmem:[%s1 + $0x20] sm:$0xff]
    %v17 = vld [vmem:[%s1 + $0x28] sm:$0xff]
    %v18 = vld [vmem:[%s1 + $0x30] sm:$0xff]
    %v19 = vld [vmem:[%s1 + $0x38] sm:$0xff]
    %v20 = vld [vmem:[%s1 + $0x40] sm:$0xff]
    %v21 = vld [vmem:[%s1 + $0x48] sm:$0xff]
    %v22 = vld [vmem:[%s1 + $0x50] sm:$0xff]
    %v23 = vld [vmem:[%s1 + $0x58] sm:$0xff]
    %v24 = vld [vmem:[%s1 + $0x60] sm:$0xff]
    %v25 = vld [vmem:[%s1 + $0x68] sm:$0xff]
    %v26 = vld [vmem:[%s1 + $0x70] sm:$0xff]
    %v27 = vld [vmem:[%s1 + $0x78] sm:$0xff]
    %v28 = vld [vmem:[%s1 + $0x80] sm:$0xff]
    %v29 = vld [vmem:[%s1 + $0x88] sm:$0xff]
    %v30 = vld [vmem:[%s1 + $0x90] sm:$0xff]
    %v31 = vld [vmem:[%s1 + $0x98] sm:$0xff]
    %v32 = vld [vmem:[%s1 + $0xa0] sm:$0xff]
    %v33 = vld [vmem:[%s1 + $0xa8] sm:$0xff]
    %v34 = vld [vmem:[%s1 + $0xb0] sm:$0xff]
    %v35 = vld [vmem:[%s1 + $0xb8] sm:$0xff]
    %v36 = vld [vmem:[%s1 + $0xc0] sm:$0xff]
    %v37 = vld [vmem:[%s1 + $0xc8] sm:$0xff]
    %v38 = vld [vmem:[%s1 + $0xd0] sm:$0xff]
    %v39 = vld [vmem:[%s1 + $0xd8] sm:$0xff]
    %v40 = vld [vmem:[%s1 + $0xe0] sm:$0xff]
    %v41 = vld [vmem:[%s1 + $0xe8] sm:$0xff]
    %v42 = vld [vmem:[%s1 + $0xf0] sm:$0xff]
    %v43 = vld [vmem:[%s1 + $0xf8] sm:$0xff]
    %v44 = vld [vmem:[%s1 + $0x100] sm:$0xff]
    %v45 = vld [vmem:[%s1 + $0x108] sm:$0xff]
    %v46 = vld [vmem:[%s1 + $0x110] sm:$0xff]
    %v47 = vld [vmem:[%s1 + $0x118] sm:$0xff]
    %v48 = vld [vmem:[%s1 + $0x120] sm:$0xff]
    %v49 = vld [vmem:[%s1 + $0x128] sm:$0xff]
    %v50 = vld [vmem:[%s1 + $0x130] sm:$0xff]
    %v51 = vld [vmem:[%s1 + $0x138] sm:$0xff]
    %v52 = vld [vmem:[%s1 + $0x140] sm:$0xff]
    %v53 = vld [vmem:[%s1 + $0x148] sm:$0xff]
    %v54 = vld [vmem:[%s1 + $0x150] sm:$0xff]
    %v55 = vld [vmem:[%s1 + $0x158] sm:$0xff]
    %v56 = vld [vmem:[%s1 + $0x160] sm:$0xff]
    %v57 = vld [vmem:[%s1 + $0x168] sm:$0xff]
    %v58 = vld [vmem:[%s1 + $0x170] sm:$0xff]
    %v59 = vld [vmem:[%s1 + $0x178] sm:$0xff]
    %v60 = vld [vmem:[%s1 + $0x180] sm:$0xff]
    %v61 = vld [vmem:[%s1 + $0x188] sm:$0xff]
    %v62 = vld [vmem:[%s1 + $0x190] sm:$0xff]
    %v63 = vld [vmem:[%s1 + $0x198] sm:$0xff]
    %v64 = vld [vmem:[%s1 + $0x1a0] sm:$0xff]
    %v65 = vld [vmem:[%s1 + $0x1a8] sm:$0xff]
    %v66 = vld [vmem:[%s1 + $0x1b0] sm:$0xff]
    %v67 = vld [vmem:[%s1 + $0x1b8] sm:$0xff]
    %v68 = vld [vmem:[%s1 + $0x1c0] sm:$0xff]
    %v69 = vld [vmem:[%s1 + $0x1c8] sm:$0xff]
    %v70 = vld [vmem:[%s1 + $0x1d0] sm:$0xff]
    %v71 = vld [vmem:[%s1 + $0x1d8] sm:$0xff]
    %v72 = vld [vmem:[%s1 + $0x1e0] sm:$0xff]
    %v73 = vld [vmem:[%s1 + $0x1e8] sm:$0xff]
    %v74 = vld [vmem:[%s1 + $0x1f0] sm:$0xff]
    %v75 = vld [vmem:[%s1 + $0x1f8] sm:$0xff]
    %v76 = vld [vmem:[%s0] sm:$0xff]
    %v77 = vld [vmem:[%s0 + $0x8] sm:$0xff]
    %v78 = vld [vmem:[%s0 + $0x10] sm:$0xff]
    %v79 = vld [vmem:[%s0 + $0x18] sm:$0xff]
    %vm80 = vcmask 261120
    %v82 = vsel %vm80, %v12, 0
    %v85 = vsel %vm80, %v13, 0
    %v88 = vsel %vm80, %v14, 0
    %v91 = vsel %vm80, %v15, 0
    %v94 = vsel %vm80, %v16, 0
    %v97 = vsel %vm80, %v17, 0
    %v100 = vsel %vm80, %v18, 0
    %v103 = vsel %vm80, %v19, 0
    %v106 = vsel %vm80, %v20, 0
    %v109 = vsel %vm80, %v21, 0
    %v112 = vsel %vm80, %v22, 0
    %v115 = vsel %vm80, %v23, 0
    %v118 = vsel %vm80, %v24, 0
    %v121 = vsel %vm80, %v25, 0
    %v124 = vsel %vm80, %v26, 0
    %v127 = vsel %vm80, %v27, 0
    %v130 = vsel %vm80, %v28, 0
    %v133 = vsel %vm80, %v29, 0
    %v136 = vsel %vm80, %v30, 0
    %v139 = vsel %vm80, %v31, 0
    %v142 = vsel %vm80, %v32, 0
    %v145 = vsel %vm80, %v33, 0
    %v148 = vsel %vm80, %v34, 0
    %v151 = vsel %vm80, %v35, 0
    %v154 = vsel %vm80, %v36, 0
    %v157 = vsel %vm80, %v37, 0
    %v160 = vsel %vm80, %v38, 0
    %v163 = vsel %vm80, %v39, 0
    %v166 = vsel %vm80, %v40, 0
    %v169 = vsel %vm80, %v41, 0
    %v172 = vsel %vm80, %v42, 0
    %v175 = vsel %vm80, %v43, 0
    %v178 = vsel %vm80, %v44, 0
    %v181 = vsel %vm80, %v45, 0
    %v184 = vsel %vm80, %v46, 0
    %v187 = vsel %vm80, %v47, 0
    %v190 = vsel %vm80, %v48, 0
    %v193 = vsel %vm80, %v49, 0
    %v196 = vsel %vm80, %v50, 0
    %v199 = vsel %vm80, %v51, 0
    %v202 = vsel %vm80, %v52, 0
    %v205 = vsel %vm80, %v53, 0
    %v208 = vsel %vm80, %v54, 0
    %v211 = vsel %vm80, %v55, 0
    %v214 = vsel %vm80, %v56, 0
    %v217 = vsel %vm80, %v57, 0
    %v220 = vsel %vm80, %v58, 0
    %v223 = vsel %vm80, %v59, 0
    %v226 = vsel %vm80, %v60, 0
    %v229 = vsel %vm80, %v61, 0
    %v232 = vsel %vm80, %v62, 0
    %v235 = vsel %vm80, %v63, 0
    %v238 = vsel %vm80, %v64, 0
    %v241 = vsel %vm80, %v65, 0
    %v244 = vsel %vm80, %v66, 0
    %v247 = vsel %vm80, %v67, 0
    %v250 = vsel %vm80, %v68, 0
    %v253 = vsel %vm80, %v69, 0
    %v256 = vsel %vm80, %v70, 0
    %v259 = vsel %vm80, %v71, 0
    %v262 = vsel %vm80, %v72, 0
    %v265 = vsel %vm80, %v73, 0
    %v268 = vsel %vm80, %v74, 0
    %v271 = vsel %vm80, %v75, 0
    %273 = vmatprep.subr.mxu0 0.0
    %274 = vmatpush1.msra.mxu0 0.0
    %275 = vmatprep.subr.mxu0 0.0
    %276 = vmatpush1.msra.mxu0 0.0
    %277 = vmatprep.subr.mxu0 0.0
    %278 = vmatpush1.msra.mxu0 0.0
    %279 = vmatprep.subr.mxu0 0.0
    %280 = vmatpush1.msra.mxu0 0.0
    %281 = vmatprep.subr.mxu0 0.0
    %282 = vmatpush1.msra.mxu0 0.0
    %283 = vmatprep.subr.mxu0 0.0
    %284 = vmatpush1.msra.mxu0 0.0
    %285 = vmatprep.subr.mxu0 0.0
    %286 = vmatpush1.msra.mxu0 0.0
    %287 = vmatprep.subr.mxu0 0.0
    %288 = vmatpush1.msra.mxu0 0.0
    %289 = vmatprep.subr.mxu0 0.0
    %290 = vmatpush1.msra.mxu0 0.0
    %291 = vmatprep.subr.mxu0 0.0
    %292 = vmatpush1.msra.mxu0 0.0
    %293 = vmatprep.subr.mxu0 0.0
    %294 = vmatpush1.msra.mxu0 0.0
    %295 = vmatprep.subr.mxu0 0.0
    %296 = vmatpush1.msra.mxu0 0.0
    %297 = vmatprep.subr.mxu0 0.0
    %298 = vmatpush1.msra.mxu0 %v79
    %299 = vmatprep.subr.mxu0 0.0
    %300 = vmatpush1.msra.mxu0 %v78
    %301 = vmatprep.subr.mxu0 0.0
    %302 = vmatpush1.msra.mxu0 %v77
    %303 = vmatprep.subr.mxu0 0.0
    %304 = vmatpush1.msra.mxu0 %v76
    %305 = vmatprep.subr.mxu0 0.0
    %306 = vmatpush2.msra.mxu0 0.0
    %307 = vmatprep.subr.mxu0 0.0
    %308 = vmatpush2.msra.mxu0 0.0
    %309 = vmatprep.subr.mxu0 0.0
    %310 = vmatpush2.msra.mxu0 0.0
    %311 = vmatprep.subr.mxu0 0.0
    %312 = vmatpush2.msra.mxu0 0.0
    %313 = vmatprep.subr.mxu0 0.0
    %314 = vmatpush2.msra.mxu0 0.0
    %315 = vmatprep.subr.mxu0 0.0
    %316 = vmatpush2.msra.mxu0 0.0
    %317 = vmatprep.subr.mxu0 0.0
    %318 = vmatpush2.msra.mxu0 0.0
    %319 = vmatprep.subr.mxu0 0.0
    %320 = vmatpush2.msra.mxu0 0.0
    %321 = vmatprep.subr.mxu0 0.0
    %322 = vmatpush2.msra.mxu0 0.0
    %323 = vmatprep.subr.mxu0 0.0
    %324 = vmatpush2.msra.mxu0 0.0
    %325 = vmatprep.subr.mxu0 0.0
    %326 = vmatpush2.msra.mxu0 0.0
    %327 = vmatprep.subr.mxu0 0.0
    %328 = vmatpush2.msra.mxu0 0.0
    %329 = vmatprep.subr.mxu0 0.0
    %330 = vmatpush2.msra.mxu0 0.0
    %331 = vmatprep.subr.mxu0 0.0
    %332 = vmatpush2.msra.mxu0 0.0
    %333 = vmatprep.subr.mxu0 0.0
    %334 = vmatpush2.msra.mxu0 0.0
    %335 = vmatprep.subr.mxu0 0.0
    %336 = vmatpush2.msra.mxu0 0.0
    %337 = vmatprep.mubr.f32.mxu0 0.0
    %338 = vmatmul.mubr.f32.gmra.mxu0 %v82
    %v339 = vpop.f32.mrf.mxu0
    %v340 = vadd.f32 0.0, %v339
    %v341 = vpop.f32.mrf.mxu0
    %342 = vmatprep.mubr.f32.mxu0 0.0
    %343 = vmatmul.mubr.f32.gmra.mxu0 %v85
    %v344 = vpop.f32.mrf.mxu0
    %v345 = vadd.f32 0.0, %v344
    %v346 = vpop.f32.mrf.mxu0
    %347 = vmatprep.mubr.f32.mxu0 0.0
    %348 = vmatmul.mubr.f32.gmra.mxu0 %v88
    %v349 = vpop.f32.mrf.mxu0
    %v350 = vadd.f32 0.0, %v349
    %v351 = vpop.f32.mrf.mxu0
    %352 = vmatprep.mubr.f32.mxu0 0.0
    %353 = vmatmul.mubr.f32.gmra.mxu0 %v91
    %v354 = vpop.f32.mrf.mxu0
    %v355 = vadd.f32 0.0, %v354
    %v356 = vpop.f32.mrf.mxu0
    %357 = vmatprep.mubr.f32.mxu0 0.0
    %358 = vmatmul.mubr.f32.gmra.mxu0 %v94
    %v359 = vpop.f32.mrf.mxu0
    %v360 = vadd.f32 0.0, %v359
    %v361 = vpop.f32.mrf.mxu0
    %362 = vmatprep.mubr.f32.mxu0 0.0
    %363 = vmatmul.mubr.f32.gmra.mxu0 %v97
    %v364 = vpop.f32.mrf.mxu0
    %v365 = vadd.f32 0.0, %v364
    %v366 = vpop.f32.mrf.mxu0
    %367 = vmatprep.mubr.f32.mxu0 0.0
    %368 = vmatmul.mubr.f32.gmra.mxu0 %v100
    %v369 = vpop.f32.mrf.mxu0
    %v370 = vadd.f32 0.0, %v369
    %v371 = vpop.f32.mrf.mxu0
    %372 = vmatprep.mubr.f32.mxu0 0.0
    %373 = vmatmul.mubr.f32.gmra.mxu0 %v103
    %v374 = vpop.f32.mrf.mxu0
    %v375 = vadd.f32 0.0, %v374
    %v376 = vpop.f32.mrf.mxu0
    %377 = vmatprep.mubr.f32.mxu0 0.0
    %378 = vmatmul.mubr.f32.gmra.mxu0 %v106
    %v379 = vpop.f32.mrf.mxu0
    %v380 = vadd.f32 0.0, %v379
    %v381 = vpop.f32.mrf.mxu0
    %382 = vmatprep.mubr.f32.mxu0 0.0
    %383 = vmatmul.mubr.f32.gmra.mxu0 %v109
    %v384 = vpop.f32.mrf.mxu0
    %v385 = vadd.f32 0.0, %v384
    %v386 = vpop.f32.mrf.mxu0
    %387 = vmatprep.mubr.f32.mxu0 0.0
    %388 = vmatmul.mubr.f32.gmra.mxu0 %v112
    %v389 = vpop.f32.mrf.mxu0
    %v390 = vadd.f32 0.0, %v389
    %v391 = vpop.f32.mrf.mxu0
    %392 = vmatprep.mubr.f32.mxu0 0.0
    %393 = vmatmul.mubr.f32.gmra.mxu0 %v115
    %v394 = vpop.f32.mrf.mxu0
    %v395 = vadd.f32 0.0, %v394
    %v396 = vpop.f32.mrf.mxu0
    %397 = vmatprep.mubr.f32.mxu0 0.0
    %398 = vmatmul.mubr.f32.gmra.mxu0 %v118
    %v399 = vpop.f32.mrf.mxu0
    %v400 = vadd.f32 0.0, %v399
    %v401 = vpop.f32.mrf.mxu0
    %402 = vmatprep.mubr.f32.mxu0 0.0
    %403 = vmatmul.mubr.f32.gmra.mxu0 %v121
    %v404 = vpop.f32.mrf.mxu0
    %v405 = vadd.f32 0.0, %v404
    %v406 = vpop.f32.mrf.mxu0
    %407 = vmatprep.mubr.f32.mxu0 0.0
    %408 = vmatmul.mubr.f32.gmra.mxu0 %v124
    %v409 = vpop.f32.mrf.mxu0
    %v410 = vadd.f32 0.0, %v409
    %v411 = vpop.f32.mrf.mxu0
    %412 = vmatprep.mubr.f32.mxu0 0.0
    %413 = vmatmul.mubr.f32.gmra.mxu0 %v127
    %v414 = vpop.f32.mrf.mxu0
    %v415 = vadd.f32 0.0, %v414
    %v416 = vpop.f32.mrf.mxu0
    %417 = vmatprep.mubr.f32.mxu0 0.0
    %418 = vmatmul.mubr.f32.gmra.mxu0 %v130
    %v419 = vpop.f32.mrf.mxu0
    %v420 = vadd.f32 0.0, %v419
    %v421 = vpop.f32.mrf.mxu0
    %422 = vmatprep.mubr.f32.mxu0 0.0
    %423 = vmatmul.mubr.f32.gmra.mxu0 %v133
    %v424 = vpop.f32.mrf.mxu0
    %v425 = vadd.f32 0.0, %v424
    %v426 = vpop.f32.mrf.mxu0
    %427 = vmatprep.mubr.f32.mxu0 0.0
    %428 = vmatmul.mubr.f32.gmra.mxu0 %v136
    %v429 = vpop.f32.mrf.mxu0
    %v430 = vadd.f32 0.0, %v429
    %v431 = vpop.f32.mrf.mxu0
    %432 = vmatprep.mubr.f32.mxu0 0.0
    %433 = vmatmul.mubr.f32.gmra.mxu0 %v139
    %v434 = vpop.f32.mrf.mxu0
    %v435 = vadd.f32 0.0, %v434
    %v436 = vpop.f32.mrf.mxu0
    %437 = vmatprep.mubr.f32.mxu0 0.0
    %438 = vmatmul.mubr.f32.gmra.mxu0 %v142
    %v439 = vpop.f32.mrf.mxu0
    %v440 = vadd.f32 0.0, %v439
    %v441 = vpop.f32.mrf.mxu0
    %442 = vmatprep.mubr.f32.mxu0 0.0
    %443 = vmatmul.mubr.f32.gmra.mxu0 %v145
    %v444 = vpop.f32.mrf.mxu0
    %v445 = vadd.f32 0.0, %v444
    %v446 = vpop.f32.mrf.mxu0
    %447 = vmatprep.mubr.f32.mxu0 0.0
    %448 = vmatmul.mubr.f32.gmra.mxu0 %v148
    %v449 = vpop.f32.mrf.mxu0
    %v450 = vadd.f32 0.0, %v449
    %v451 = vpop.f32.mrf.mxu0
    %452 = vmatprep.mubr.f32.mxu0 0.0
    %453 = vmatmul.mubr.f32.gmra.mxu0 %v151
    %v454 = vpop.f32.mrf.mxu0
    %v455 = vadd.f32 0.0, %v454
    %v456 = vpop.f32.mrf.mxu0
    %457 = vmatprep.mubr.f32.mxu0 0.0
    %458 = vmatmul.mubr.f32.gmra.mxu0 %v154
    %v459 = vpop.f32.mrf.mxu0
    %v460 = vadd.f32 0.0, %v459
    %v461 = vpop.f32.mrf.mxu0
    %462 = vmatprep.mubr.f32.mxu0 0.0
    %463 = vmatmul.mubr.f32.gmra.mxu0 %v157
    %v464 = vpop.f32.mrf.mxu0
    %v465 = vadd.f32 0.0, %v464
    %v466 = vpop.f32.mrf.mxu0
    %467 = vmatprep.mubr.f32.mxu0 0.0
    %468 = vmatmul.mubr.f32.gmra.mxu0 %v160
    %v469 = vpop.f32.mrf.mxu0
    %v470 = vadd.f32 0.0, %v469
    %v471 = vpop.f32.mrf.mxu0
    %472 = vmatprep.mubr.f32.mxu0 0.0
    %473 = vmatmul.mubr.f32.gmra.mxu0 %v163
    %v474 = vpop.f32.mrf.mxu0
    %v475 = vadd.f32 0.0, %v474
    %v476 = vpop.f32.mrf.mxu0
    %477 = vmatprep.mubr.f32.mxu0 0.0
    %478 = vmatmul.mubr.f32.gmra.mxu0 %v166
    %v479 = vpop.f32.mrf.mxu0
    %v480 = vadd.f32 0.0, %v479
    %v481 = vpop.f32.mrf.mxu0
    %482 = vmatprep.mubr.f32.mxu0 0.0
    %483 = vmatmul.mubr.f32.gmra.mxu0 %v169
    %v484 = vpop.f32.mrf.mxu0
    %v485 = vadd.f32 0.0, %v484
    %v486 = vpop.f32.mrf.mxu0
    %487 = vmatprep.mubr.f32.mxu0 0.0
    %488 = vmatmul.mubr.f32.gmra.mxu0 %v172
    %v489 = vpop.f32.mrf.mxu0
    %v490 = vadd.f32 0.0, %v489
    %v491 = vpop.f32.mrf.mxu0
    %492 = vmatprep.mubr.f32.mxu0 0.0
    %493 = vmatmul.mubr.f32.gmra.mxu0 %v175
    %v494 = vpop.f32.mrf.mxu0
    %v495 = vadd.f32 0.0, %v494
    %v496 = vpop.f32.mrf.mxu0
    %497 = vmatprep.mubr.f32.mxu0 0.0
    %498 = vmatmul.mubr.f32.gmra.mxu0 %v178
    %v499 = vpop.f32.mrf.mxu0
    %v500 = vadd.f32 0.0, %v499
    %v501 = vpop.f32.mrf.mxu0
    %502 = vmatprep.mubr.f32.mxu0 0.0
    %503 = vmatmul.mubr.f32.gmra.mxu0 %v181
    %v504 = vpop.f32.mrf.mxu0
    %v505 = vadd.f32 0.0, %v504
    %v506 = vpop.f32.mrf.mxu0
    %507 = vmatprep.mubr.f32.mxu0 0.0
    %508 = vmatmul.mubr.f32.gmra.mxu0 %v184
    %v509 = vpop.f32.mrf.mxu0
    %v510 = vadd.f32 0.0, %v509
    %v511 = vpop.f32.mrf.mxu0
    %512 = vmatprep.mubr.f32.mxu0 0.0
    %513 = vmatmul.mubr.f32.gmra.mxu0 %v187
    %v514 = vpop.f32.mrf.mxu0
    %v515 = vadd.f32 0.0, %v514
    %v516 = vpop.f32.mrf.mxu0
    %517 = vmatprep.mubr.f32.mxu0 0.0
    %518 = vmatmul.mubr.f32.gmra.mxu0 %v190
    %v519 = vpop.f32.mrf.mxu0
    %v520 = vadd.f32 0.0, %v519
    %v521 = vpop.f32.mrf.mxu0
    %522 = vmatprep.mubr.f32.mxu0 0.0
    %523 = vmatmul.mubr.f32.gmra.mxu0 %v193
    %v524 = vpop.f32.mrf.mxu0
    %v525 = vadd.f32 0.0, %v524
    %v526 = vpop.f32.mrf.mxu0
    %527 = vmatprep.mubr.f32.mxu0 0.0
    %528 = vmatmul.mubr.f32.gmra.mxu0 %v196
    %v529 = vpop.f32.mrf.mxu0
    %v530 = vadd.f32 0.0, %v529
    %v531 = vpop.f32.mrf.mxu0
    %532 = vmatprep.mubr.f32.mxu0 0.0
    %533 = vmatmul.mubr.f32.gmra.mxu0 %v199
    %v534 = vpop.f32.mrf.mxu0
    %v535 = vadd.f32 0.0, %v534
    %v536 = vpop.f32.mrf.mxu0
    %537 = vmatprep.mubr.f32.mxu0 0.0
    %538 = vmatmul.mubr.f32.gmra.mxu0 %v202
    %v539 = vpop.f32.mrf.mxu0
    %v540 = vadd.f32 0.0, %v539
    %v541 = vpop.f32.mrf.mxu0
    %542 = vmatprep.mubr.f32.mxu0 0.0
    %543 = vmatmul.mubr.f32.gmra.mxu0 %v205
    %v544 = vpop.f32.mrf.mxu0
    %v545 = vadd.f32 0.0, %v544
    %v546 = vpop.f32.mrf.mxu0
    %547 = vmatprep.mubr.f32.mxu0 0.0
    %548 = vmatmul.mubr.f32.gmra.mxu0 %v208
    %v549 = vpop.f32.mrf.mxu0
    %v550 = vadd.f32 0.0, %v549
    %v551 = vpop.f32.mrf.mxu0
    %552 = vmatprep.mubr.f32.mxu0 0.0
    %553 = vmatmul.mubr.f32.gmra.mxu0 %v211
    %v554 = vpop.f32.mrf.mxu0
    %v555 = vadd.f32 0.0, %v554
    %v556 = vpop.f32.mrf.mxu0
    %557 = vmatprep.mubr.f32.mxu0 0.0
    %558 = vmatmul.mubr.f32.gmra.mxu0 %v214
    %v559 = vpop.f32.mrf.mxu0
    %v560 = vadd.f32 0.0, %v559
    %v561 = vpop.f32.mrf.mxu0
    %562 = vmatprep.mubr.f32.mxu0 0.0
    %563 = vmatmul.mubr.f32.gmra.mxu0 %v217
    %v564 = vpop.f32.mrf.mxu0
    %v565 = vadd.f32 0.0, %v564
    %v566 = vpop.f32.mrf.mxu0
    %567 = vmatprep.mubr.f32.mxu0 0.0
    %568 = vmatmul.mubr.f32.gmra.mxu0 %v220
    %v569 = vpop.f32.mrf.mxu0
    %v570 = vadd.f32 0.0, %v569
    %v571 = vpop.f32.mrf.mxu0
    %572 = vmatprep.mubr.f32.mxu0 0.0
    %573 = vmatmul.mubr.f32.gmra.mxu0 %v223
    %v574 = vpop.f32.mrf.mxu0
    %v575 = vadd.f32 0.0, %v574
    %v576 = vpop.f32.mrf.mxu0
    %577 = vmatprep.mubr.f32.mxu0 0.0
    %578 = vmatmul.mubr.f32.gmra.mxu0 %v226
    %v579 = vpop.f32.mrf.mxu0
    %v580 = vadd.f32 0.0, %v579
    %v581 = vpop.f32.mrf.mxu0
    %582 = vmatprep.mubr.f32.mxu0 0.0
    %583 = vmatmul.mubr.f32.gmra.mxu0 %v229
    %v584 = vpop.f32.mrf.mxu0
    %v585 = vadd.f32 0.0, %v584
    %v586 = vpop.f32.mrf.mxu0
    %587 = vmatprep.mubr.f32.mxu0 0.0
    %588 = vmatmul.mubr.f32.gmra.mxu0 %v232
    %v589 = vpop.f32.mrf.mxu0
    %v590 = vadd.f32 0.0, %v589
    %v591 = vpop.f32.mrf.mxu0
    %592 = vmatprep.mubr.f32.mxu0 0.0
    %593 = vmatmul.mubr.f32.gmra.mxu0 %v235
    %v594 = vpop.f32.mrf.mxu0
    %v595 = vadd.f32 0.0, %v594
    %v596 = vpop.f32.mrf.mxu0
    %597 = vmatprep.mubr.f32.mxu0 0.0
    %598 = vmatmul.mubr.f32.gmra.mxu0 %v238
    %v599 = vpop.f32.mrf.mxu0
    %v600 = vadd.f32 0.0, %v599
    %v601 = vpop.f32.mrf.mxu0
    %602 = vmatprep.mubr.f32.mxu0 0.0
    %603 = vmatmul.mubr.f32.gmra.mxu0 %v241
    %v604 = vpop.f32.mrf.mxu0
    %v605 = vadd.f32 0.0, %v604
    %v606 = vpop.f32.mrf.mxu0
    %607 = vmatprep.mubr.f32.mxu0 0.0
    %608 = vmatmul.mubr.f32.gmra.mxu0 %v244
    %v609 = vpop.f32.mrf.mxu0
    %v610 = vadd.f32 0.0, %v609
    %v611 = vpop.f32.mrf.mxu0
    %612 = vmatprep.mubr.f32.mxu0 0.0
    %613 = vmatmul.mubr.f32.gmra.mxu0 %v247
    %v614 = vpop.f32.mrf.mxu0
    %v615 = vadd.f32 0.0, %v614
    %v616 = vpop.f32.mrf.mxu0
    %617 = vmatprep.mubr.f32.mxu0 0.0
    %618 = vmatmul.mubr.f32.gmra.mxu0 %v250
    %v619 = vpop.f32.mrf.mxu0
    %v620 = vadd.f32 0.0, %v619
    %v621 = vpop.f32.mrf.mxu0
    %622 = vmatprep.mubr.f32.mxu0 0.0
    %623 = vmatmul.mubr.f32.gmra.mxu0 %v253
    %v624 = vpop.f32.mrf.mxu0
    %v625 = vadd.f32 0.0, %v624
    %v626 = vpop.f32.mrf.mxu0
    %627 = vmatprep.mubr.f32.mxu0 0.0
    %628 = vmatmul.mubr.f32.gmra.mxu0 %v256
    %v629 = vpop.f32.mrf.mxu0
    %v630 = vadd.f32 0.0, %v629
    %v631 = vpop.f32.mrf.mxu0
    %632 = vmatprep.mubr.f32.mxu0 0.0
    %633 = vmatmul.mubr.f32.gmra.mxu0 %v259
    %v634 = vpop.f32.mrf.mxu0
    %v635 = vadd.f32 0.0, %v634
    %v636 = vpop.f32.mrf.mxu0
    %637 = vmatprep.mubr.f32.mxu0 0.0
    %638 = vmatmul.mubr.f32.gmra.mxu0 %v262
    %v639 = vpop.f32.mrf.mxu0
    %v640 = vadd.f32 0.0, %v639
    %v641 = vpop.f32.mrf.mxu0
    %642 = vmatprep.mubr.f32.mxu0 0.0
    %643 = vmatmul.mubr.f32.gmra.mxu0 %v265
    %v644 = vpop.f32.mrf.mxu0
    %v645 = vadd.f32 0.0, %v644
    %v646 = vpop.f32.mrf.mxu0
    %647 = vmatprep.mubr.f32.mxu0 0.0
    %648 = vmatmul.mubr.f32.gmra.mxu0 %v268
    %v649 = vpop.f32.mrf.mxu0
    %v650 = vadd.f32 0.0, %v649
    %v651 = vpop.f32.mrf.mxu0
    %652 = vmatprep.mubr.f32.mxu0 0.0
    %653 = vmatmul.mubr.f32.gmra.mxu0 %v271
    %v654 = vpop.f32.mrf.mxu0
    %v655 = vadd.f32 0.0, %v654
    %v656 = vpop.f32.mrf.mxu0
    %657 = vdwg.mxu0
    %658 = vst [vmem:[#allocation2] sm:$0xff] %v340
    %659 = vst [vmem:[#allocation2 + $0x8] sm:$0xff] %v345
    %660 = vst [vmem:[#allocation2 + $0x10] sm:$0xff] %v350
    %661 = vst [vmem:[#allocation2 + $0x18] sm:$0xff] %v355
    %662 = vst [vmem:[#allocation2 + $0x20] sm:$0xff] %v360
    %663 = vst [vmem:[#allocation2 + $0x28] sm:$0xff] %v365
    %664 = vst [vmem:[#allocation2 + $0x30] sm:$0xff] %v370
    %665 = vst [vmem:[#allocation2 + $0x38] sm:$0xff] %v375
    %666 = vst [vmem:[#allocation2 + $0x40] sm:$0xff] %v380
    %667 = vst [vmem:[#allocation2 + $0x48] sm:$0xff] %v385
    %668 = vst [vmem:[#allocation2 + $0x50] sm:$0xff] %v390
    %669 = vst [vmem:[#allocation2 + $0x58] sm:$0xff] %v395
    %670 = vst [vmem:[#allocation2 + $0x60] sm:$0xff] %v400
    %671 = vst [vmem:[#allocation2 + $0x68] sm:$0xff] %v405
    %672 = vst [vmem:[#allocation2 + $0x70] sm:$0xff] %v410
    %673 = vst [vmem:[#allocation2 + $0x78] sm:$0xff] %v415
    %674 = vst [vmem:[#allocation2 + $0x80] sm:$0xff] %v420
    %675 = vst [vmem:[#allocation2 + $0x88] sm:$0xff] %v425
    %676 = vst [vmem:[#allocation2 + $0x90] sm:$0xff] %v430
    %677 = vst [vmem:[#allocation2 + $0x98] sm:$0xff] %v435
    %678 = vst [vmem:[#allocation2 + $0xa0] sm:$0xff] %v440
    %679 = vst [vmem:[#allocation2 + $0xa8] sm:$0xff] %v445
    %680 = vst [vmem:[#allocation2 + $0xb0] sm:$0xff] %v450
    %681 = vst [vmem:[#allocation2 + $0xb8] sm:$0xff] %v455
    %682 = vst [vmem:[#allocation2 + $0xc0] sm:$0xff] %v460
    %683 = vst [vmem:[#allocation2 + $0xc8] sm:$0xff] %v465
    %684 = vst [vmem:[#allocation2 + $0xd0] sm:$0xff] %v470
    %685 = vst [vmem:[#allocation2 + $0xd8] sm:$0xff] %v475
    %686 = vst [vmem:[#allocation2 + $0xe0] sm:$0xff] %v480
    %687 = vst [vmem:[#allocation2 + $0xe8] sm:$0xff] %v485
    %688 = vst [vmem:[#allocation2 + $0xf0] sm:$0xff] %v490
    %689 = vst [vmem:[#allocation2 + $0xf8] sm:$0xff] %v495
    %690 = vst [vmem:[#allocation2 + $0x100] sm:$0xff] %v500
    %691 = vst [vmem:[#allocation2 + $0x108] sm:$0xff] %v505
    %692 = vst [vmem:[#allocation2 + $0x110] sm:$0xff] %v510
    %693 = vst [vmem:[#allocation2 + $0x118] sm:$0xff] %v515
    %694 = vst [vmem:[#allocation2 + $0x120] sm:$0xff] %v520
    %695 = vst [vmem:[#allocation2 + $0x128] sm:$0xff] %v525
    %696 = vst [vmem:[#allocation2 + $0x130] sm:$0xff] %v530
    %697 = vst [vmem:[#allocation2 + $0x138] sm:$0xff] %v535
    %698 = vst [vmem:[#allocation2 + $0x140] sm:$0xff] %v540
    %699 = vst [vmem:[#allocation2 + $0x148] sm:$0xff] %v545
    %700 = vst [vmem:[#allocation2 + $0x150] sm:$0xff] %v550
    %701 = vst [vmem:[#allocation2 + $0x158] sm:$0xff] %v555
    %702 = vst [vmem:[#allocation2 + $0x160] sm:$0xff] %v560
    %703 = vst [vmem:[#allocation2 + $0x168] sm:$0xff] %v565
    %704 = vst [vmem:[#allocation2 + $0x170] sm:$0xff] %v570
    %705 = vst [vmem:[#allocation2 + $0x178] sm:$0xff] %v575
    %706 = vst [vmem:[#allocation2 + $0x180] sm:$0xff] %v580
    %707 = vst [vmem:[#allocation2 + $0x188] sm:$0xff] %v585
    %708 = vst [vmem:[#allocation2 + $0x190] sm:$0xff] %v590
    %709 = vst [vmem:[#allocation2 + $0x198] sm:$0xff] %v595
    %710 = vst [vmem:[#allocation2 + $0x1a0] sm:$0xff] %v600
    %711 = vst [vmem:[#allocation2 + $0x1a8] sm:$0xff] %v605
    %712 = vst [vmem:[#allocation2 + $0x1b0] sm:$0xff] %v610
    %713 = vst [vmem:[#allocation2 + $0x1b8] sm:$0xff] %v615
    %714 = vst [vmem:[#allocation2 + $0x1c0] sm:$0xff] %v620
    %715 = vst [vmem:[#allocation2 + $0x1c8] sm:$0xff] %v625
    %716 = vst [vmem:[#allocation2 + $0x1d0] sm:$0xff] %v630
    %717 = vst [vmem:[#allocation2 + $0x1d8] sm:$0xff] %v635
    %718 = vst [vmem:[#allocation2 + $0x1e0] sm:$0xff] %v640
    %719 = vst [vmem:[#allocation2 + $0x1e8] sm:$0xff] %v645
    %720 = vst [vmem:[#allocation2 + $0x1f0] sm:$0xff] %v650
    %721 = vst [vmem:[#allocation2 + $0x1f8] sm:$0xff] %v655
    // Predicated region
    $region10: #{tpu_custom_call.1} parent=1 // pred_check
      _
    $region11: #{tpu_custom_call.1} parent=1 // pred_check_branch
      %723 = sbr.rel (0) target = $region13
    $region12: #{tpu_custom_call.1} parent=1 // pred_region
      %s725 = ssub.s32 8192, 8192
      %726 = vsyncadd [#allocation3], %s725
      %s727 = sshll.u32 [#allocation2], 4
      %s728 = int_to_ptr.vmem [resolvable:$true] %s727
      %733 = dma.vmem_to_hbm [thread:$0]  %s728, 8192, %s2, [#allocation3], 128, 128, 8
    $region13: #{tpu_custom_call.1} parent=1 // pred_fallthru
      _
    // Predicated region
    $region14: #{tpu_custom_call.1} parent=1 // pred_check
      _
    $region15: #{tpu_custom_call.1} parent=1 // pred_check_branch
      %735 = sbr.rel (0) target = $region17
    $region16: #{tpu_custom_call.1} parent=1 // pred_region
      %736 = dma.done [#allocation3], 8192
    $region17: #{tpu_custom_call.1} parent=1 // pred_fallthru
      _
    %737 = vsyncpa [#allocation3], 1

</llo_original>
